<compile_context>
chip_gen: v5e
topology: v5e:2x2
jax: 0.10.0
libtpu: 0.0.40
codegen_flags: <defaults>
</compile_context>

<pallas_src>
import functools

import jax
import jax.numpy as jnp
from jax.experimental import pallas as pl
from jax.experimental.pallas import tpu as pltpu

LANES = 128      # vreg lane width (v5e/v6e/v7x)
SUBLANES = 8     # f32 sublanes per vreg


def _cdiv(a, b):
    return -(-a // b)


def _round_up(x, m):
    return _cdiv(x, m) * m


def _chip_config():
    """Per-generation tiling derived from VMEM capacity at trace time."""
    try:
        vmem_cap = int(pltpu.get_tpu_info().vmem_capacity_bytes)
    except Exception:
        vmem_cap = 0
    if vmem_cap > (96 << 20):
        # v5e / v6e class: 128 MiB physical VMEM, single TensorCore.
        return {"block_bytes": 4 << 20, "vmem_limit": 64 << 20, "splits": 1}
    # v7x class (64 MiB VMEM, 2 TensorCores) or unknown backend: conservative.
    return {"block_bytes": 2 << 20, "vmem_limit": 32 << 20, "splits": 2}


def _nll_unscaled(y, mu, ls):
    # exp(-ls) * (y - mu)^2 + ls ; the 0.5 factor is applied once, outside.
    d = y - mu
    return jnp.exp(-ls) * d * d + ls


def _nll_none_kernel(y_ref, mu_ref, ls_ref, out_ref):
    """Elementwise NLL on one (tn, C) tile; OOB rows are dropped on writeback."""
    out_ref[...] = (0.5 * _nll_unscaled(
        y_ref[...].astype(jnp.float32),
        mu_ref[...].astype(jnp.float32),
        ls_ref[...].astype(jnp.float32),
    )).astype(out_ref.dtype)


def _nll_reduce_kernel(y_ref, mu_ref, ls_ref, out_ref, acc_ref, *,
                       total_rows, need_mask):
    """Per-split partial sum: VMEM vector accumulator, one reduce at the end."""
    s = pl.program_id(0)               # split axis ("parallel", per-TC on v7x)
    i = pl.program_id(1)               # row-block axis ("arbitrary", carries acc)
    steps = pl.num_programs(1)

    @pl.when(i == 0)
    def _():
        acc_ref[...] = jnp.zeros_like(acc_ref)

    per = _nll_unscaled(
        y_ref[...].astype(jnp.float32),
        mu_ref[...].astype(jnp.float32),
        ls_ref[...].astype(jnp.float32),
    )

    if need_mask:
        # Zero rows past the end of the input: ragged last block and any
        # duplicated tail blocks produced by the clamped index_map.  Must stay
        # a select (garbage rows may hold Inf/NaN after exp).
        tn = y_ref.shape[0]
        row0 = (s * steps + i) * tn     # logical, un-clamped first row of tile
        row_ids = row0 + jax.lax.broadcasted_iota(jnp.int32, (tn, 1), 0)
        per = jnp.where(row_ids < total_rows, per, 0.0)

    acc_ref[...] += per                 # pure VPU add; no cross-lane work per step

    @pl.when(i == steps - 1)
    def _():
        # One lane reduce + one sublane reduce per split, splat into the tile.
        part = jnp.sum(jnp.sum(acc_ref[...], axis=1, keepdims=True),
                       axis=0, keepdims=True)             # (1, 1) f32
        out_ref[...] = jnp.broadcast_to(part, (SUBLANES, LANES))


@functools.partial(jax.jit, static_argnames=("reduction", "row_tile", "splits"))
def nll_loss(y_true, mu_pred, log_sigma_sq_pred, *, reduction="mean",
             row_tile=None, splits=None):
    if not (y_true.shape == mu_pred.shape == log_sigma_sq_pred.shape):
        raise ValueError(
            "Input tensors y_true, mu_pred, and log_sigma_sq_pred must have the "
            "same shape.")
    if reduction not in ("mean", "sum", "none"):
        raise ValueError(f"Reduction method '{reduction}' not supported.")

    orig_shape = y_true.shape
    total = y_true.size
    out_dtype = jnp.result_type(y_true.dtype, mu_pred.dtype,
                                log_sigma_sq_pred.dtype)

    if total == 0:
        if reduction == "none":
            return jnp.zeros(orig_shape, out_dtype)
        z = jnp.float32(0.0)
        if reduction == "mean":
            z = z / jnp.float32(0.0)    # NaN, matching torch mean() of empty
        return z.astype(out_dtype)

    cfg = _chip_config()
    if splits is None:
        splits = cfg["splits"]
    block_bytes = cfg["block_bytes"]
    vmem_limit = cfg["vmem_limit"]

    # ---- 2-D view, zero-copy: collapse leading dims, keep last dim as lanes ----
    C = orig_shape[-1] if y_true.ndim >= 2 else 1
    R = total // C

    def view2d(x):
        return x.reshape(R, C)

    y2 = view2d(y_true)
    mu2 = view2d(mu_pred)
    ls2 = view2d(log_sigma_sq_pred)

    # ---- row tiling (last-dim block is always the full C: always legal) --------
    if row_tile is not None:
        tn_target = max(int(row_tile), SUBLANES)
    else:
        tn_target = max(block_bytes // (C * 4), SUBLANES)   # budget in f32 bytes
    if R < SUBLANES:
        tn = R                                               # block == full dim
    else:
        tn = min(_round_up(tn_target, SUBLANES), _round_up(R, SUBLANES))
    num_blocks = _cdiv(R, tn)

    if reduction == "none":
        out2 = pl.pallas_call(
            _nll_none_kernel,
            out_shape=jax.ShapeDtypeStruct((R, C), out_dtype),
            grid_spec=pltpu.PrefetchScalarGridSpec(
                num_scalar_prefetch=0,
                grid=(num_blocks,),
                in_specs=[pl.BlockSpec((tn, C), lambda i: (i, 0))] * 3,
                out_specs=pl.BlockSpec((tn, C), lambda i: (i, 0)),
            ),
            compiler_params=pltpu.CompilerParams(
                dimension_semantics=("parallel",),     # no cross-step carry
                vmem_limit_bytes=vmem_limit),
        )(y2, mu2, ls2)
        return out2.reshape(orig_shape)                 # free: leading dims only

    # ---- 'mean' / 'sum': split-parallel partial sums ---------------------------
    n_splits = max(1, min(int(splits), num_blocks))
    steps = _cdiv(num_blocks, n_splits)
    last_block = num_blocks - 1
    # Mask only when a tile can contain logical rows >= R (ragged last tile
    # and/or duplicated clamped tail blocks from an uneven split).
    need_mask = (R % tn != 0) or (num_blocks % n_splits != 0)

    def row_block_map(s, i):
        # Clamp keeps duplicated tail blocks in-bounds; the in-kernel row mask
        # zeroes their contribution.
        return (jnp.minimum(s * steps + i, last_block), 0)

    partial_tiles = pl.pallas_call(
        functools.partial(_nll_reduce_kernel, total_rows=R, need_mask=need_mask),
        out_shape=jax.ShapeDtypeStruct((n_splits * SUBLANES, LANES), jnp.float32),
        grid_spec=pltpu.PrefetchScalarGridSpec(
            num_scalar_prefetch=0,
            grid=(n_splits, steps),
            in_specs=[pl.BlockSpec((tn, C), row_block_map)] * 3,
            out_specs=pl.BlockSpec((SUBLANES, LANES), lambda s, i: (s, 0)),
            scratch_shapes=[pltpu.VMEM((tn, C), jnp.float32)],
        ),
        compiler_params=pltpu.CompilerParams(
            dimension_semantics=("parallel", "arbitrary"),
            vmem_limit_bytes=vmem_limit),
    )(y2, mu2, ls2)

    # One value per split; hoisted 0.5 applied once here.
    total_sum = 0.5 * jnp.sum(partial_tiles[::SUBLANES, 0])
    if reduction == "mean":
        # NOTE: f32 divide/accumulation; fine for a loss scalar.
        total_sum = total_sum / jnp.float32(total)
    return total_sum.astype(out_dtype)


def _reference(y, mu, ls, reduction="mean"):
    per = 0.5 * jnp.exp(-ls) * (y - mu) ** 2 + 0.5 * ls
    if reduction == "mean":
        return per.mean()
    if reduction == "sum":
        return per.sum()
    return per


if __name__ == "__main__":
    base_key = jax.random.PRNGKey(0)
    ok = True
    # Primary small case (16, 32) on auto-tiling, plus an awkward shape with
    # explicit tiny tiles that exercises the ragged-row mask, a multi-block
    # grid, dropped OOB output writes, and the clamped 2-way split tail path.
    cases = (
        ((16, 32), {}),
        ((37, 40), {"row_tile": 8, "splits": 2}),
    )
    for case_idx, (shape, kw) in enumerate(cases):
        k1, k2, k3 = jax.random.split(jax.random.fold_in(base_key, case_idx), 3)
        y_true = jax.random.normal(k1, shape, dtype=jnp.float32)
        mu_pred = jax.random.normal(k2, shape, dtype=jnp.float32)
        log_sigma_sq_pred = 0.5 * jax.random.normal(k3, shape, dtype=jnp.float32)

        for red in ("mean", "sum", "none"):
            out = nll_loss(y_true, mu_pred, log_sigma_sq_pred,
                           reduction=red, **kw)
            out = jax.block_until_ready(out)
            ref = _reference(y_true, mu_pred, log_sigma_sq_pred, reduction=red)
            if not jnp.allclose(out, ref, rtol=1e-5, atol=1e-5):
                ok = False
                print(f"MISMATCH shape={shape} reduction={red}")

    if ok:
        print("KERNEL_OK")
</pallas_src>

<mosaic_0001>
module attributes {stable_mosaic.version = 11 : i64} {
  func.func @_nll_reduce_kernel(%arg0: i32, %arg1: i32, %arg2: memref<16x32xf32, #tpu.memory_space<vmem>>, %arg3: memref<16x32xf32, #tpu.memory_space<vmem>>, %arg4: memref<16x32xf32, #tpu.memory_space<vmem>>, %arg5: memref<8x128xf32, #tpu.memory_space<vmem>>, %arg6: memref<16x32xf32, #tpu.memory_space<vmem>>) attributes {dimension_semantics = [#tpu.dimension_semantics<parallel>, #tpu.dimension_semantics<arbitrary>], iteration_bounds = array<i64: 1, 1>, scalar_prefetch = 0 : i64, scratch_operands = 1 : i64, tpu.core_type = #tpu.core_type<tc>, window_params = [{transform_indices = @transform_0, window_bounds = array<i64: 16, 32>}, {transform_indices = @transform_1, window_bounds = array<i64: 16, 32>}, {transform_indices = @transform_2, window_bounds = array<i64: 16, 32>}, {transform_indices = @transform_3, window_bounds = array<i64: 8, 128>}]} {
    %c0_i32 = arith.constant 0 : i32
    %0 = arith.cmpi eq, %arg1, %c0_i32 : i32
    %1 = arith.extui %0 : i1 to i32
    %c0_i32_0 = arith.constant 0 : i32
    %2 = arith.cmpi ne, %1, %c0_i32_0 : i32
    scf.if %2 {
      %cst_12 = arith.constant 0.000000e+00 : f32
      %19 = vector.broadcast %cst_12 : f32 to vector<16x32xf32>
      %c0_13 = arith.constant 0 : index
      %c0_14 = arith.constant 0 : index
      %20 = vector.load %arg6[%c0_13, %c0_14] : memref<16x32xf32, #tpu.memory_space<vmem>>, vector<16x32xf32>
      tpu.vector_store %arg6[%c0_13, %c0_14], %19 {strides = array<i32>} : memref<16x32xf32, #tpu.memory_space<vmem>>, vector<16x32xf32>,
    } else {
    }
    %c0 = arith.constant 0 : index
    %c0_1 = arith.constant 0 : index
    %3 = vector.load %arg2[%c0, %c0_1] : memref<16x32xf32, #tpu.memory_space<vmem>>, vector<16x32xf32>
    %c0_2 = arith.constant 0 : index
    %c0_3 = arith.constant 0 : index
    %4 = vector.load %arg3[%c0_2, %c0_3] : memref<16x32xf32, #tpu.memory_space<vmem>>, vector<16x32xf32>
    %c0_4 = arith.constant 0 : index
    %c0_5 = arith.constant 0 : index
    %5 = vector.load %arg4[%c0_4, %c0_5] : memref<16x32xf32, #tpu.memory_space<vmem>>, vector<16x32xf32>
    %6 = arith.subf %3, %4 : vector<16x32xf32>
    %cst = arith.constant 0.000000e+00 : f32
    %7 = vector.broadcast %cst : f32 to vector<16x32xf32>
    %8 = arith.subf %7, %5 : vector<16x32xf32>
    %9 = math.exp %8 : vector<16x32xf32>
    %10 = arith.mulf %9, %6 : vector<16x32xf32>
    %11 = arith.mulf %10, %6 : vector<16x32xf32>
    %12 = arith.addf %11, %5 : vector<16x32xf32>
    %c0_6 = arith.constant 0 : index
    %c0_7 = arith.constant 0 : index
    %13 = vector.load %arg6[%c0_6, %c0_7] : memref<16x32xf32, #tpu.memory_space<vmem>>, vector<16x32xf32>
    %14 = arith.addf %13, %12 : vector<16x32xf32>
    %c0_8 = arith.constant 0 : index
    %c0_9 = arith.constant 0 : index
    %15 = vector.load %arg6[%c0_8, %c0_9] : memref<16x32xf32, #tpu.memory_space<vmem>>, vector<16x32xf32>
    tpu.vector_store %arg6[%c0_8, %c0_9], %14 {strides = array<i32>} : memref<16x32xf32, #tpu.memory_space<vmem>>, vector<16x32xf32>,
    %c0_i32_10 = arith.constant 0 : i32
    %16 = arith.cmpi eq, %arg1, %c0_i32_10 : i32
    %17 = arith.extui %16 : i1 to i32
    %c0_i32_11 = arith.constant 0 : i32
    %18 = arith.cmpi ne, %17, %c0_i32_11 : i32
    scf.if %18 {
      %c0_12 = arith.constant 0 : index
      %c0_13 = arith.constant 0 : index
      %19 = vector.load %arg6[%c0_12, %c0_13] : memref<16x32xf32, #tpu.memory_space<vmem>>, vector<16x32xf32>
      %cst_14 = arith.constant dense<0.000000e+00> : vector<16xf32>
      %20 = vector.multi_reduction <add>, %19, %cst_14 [1] : vector<16x32xf32> to vector<16xf32>
      %21 = vector.shape_cast %20 : vector<16xf32> to vector<16x1xf32>
      %cst_15 = arith.constant dense<0.000000e+00> : vector<1xf32>
      %22 = vector.multi_reduction <add>, %21, %cst_15 [0] : vector<16x1xf32> to vector<1xf32>
      %23 = vector.shape_cast %22 : vector<1xf32> to vector<1x1xf32>
      %24 = vector.shape_cast %23 : vector<1x1xf32> to vector<1x1xf32>
      %25 = vector.broadcast %24 : vector<1x1xf32> to vector<8x128xf32>
      %c0_16 = arith.constant 0 : index
      %c0_17 = arith.constant 0 : index
      %26 = vector.load %arg5[%c0_16, %c0_17] : memref<8x128xf32, #tpu.memory_space<vmem>>, vector<8x128xf32>
      tpu.vector_store %arg5[%c0_16, %c0_17], %25 {strides = array<i32>} : memref<8x128xf32, #tpu.memory_space<vmem>>, vector<8x128xf32>,
    } else {
    }
    return
  }
  func.func @transform_0(%arg0: i32, %arg1: i32) -> (i32, i32) {
    %c1_i32 = arith.constant 1 : i32
    %0 = arith.muli %arg0, %c1_i32 : i32
    %1 = arith.addi %0, %arg1 : i32
    %c0_i32 = arith.constant 0 : i32
    %2 = arith.minsi %1, %c0_i32 : i32
    %c0_i32_0 = arith.constant 0 : i32
    %c0_i32_1 = arith.constant 0 : i32
    return %2, %c0_i32_0 : i32, i32
  }
  func.func @transform_1(%arg0: i32, %arg1: i32) -> (i32, i32) {
    %c1_i32 = arith.constant 1 : i32
    %0 = arith.muli %arg0, %c1_i32 : i32
    %1 = arith.addi %0, %arg1 : i32
    %c0_i32 = arith.constant 0 : i32
    %2 = arith.minsi %1, %c0_i32 : i32
    %c0_i32_0 = arith.constant 0 : i32
    %c0_i32_1 = arith.constant 0 : i32
    return %2, %c0_i32_0 : i32, i32
  }
  func.func @transform_2(%arg0: i32, %arg1: i32) -> (i32, i32) {
    %c1_i32 = arith.constant 1 : i32
    %0 = arith.muli %arg0, %c1_i32 : i32
    %1 = arith.addi %0, %arg1 : i32
    %c0_i32 = arith.constant 0 : i32
    %2 = arith.minsi %1, %c0_i32 : i32
    %c0_i32_0 = arith.constant 0 : i32
    %c0_i32_1 = arith.constant 0 : i32
    return %2, %c0_i32_0 : i32, i32
  }
  func.func @transform_3(%arg0: i32, %arg1: i32) -> (i32, i32) {
    %c0_i32 = arith.constant 0 : i32
    %c0_i32_0 = arith.constant 0 : i32
    return %arg0, %c0_i32 : i32, i32
  }
}

</mosaic_0001>

<llo_original>
// kernel: nll_loss.1
$region0: #{nll_loss.1}
  #allocation0 [shape = 'u32[]', space=smem, size = 0x4, offset = 0x4, fixed_abs, tag = 'smem constant byte address 0x4 - core index']
  #allocation1 [shape = 'u32[72,128]{1,0:T(1,128)}', space=vmem, size = 0x9000, scoped, tag = 'internal scratch']
  #allocation2 [shape = 'f32[16,32]{1,0:T(8,128)}', space=vmem, size = 0x2000, scoped, tag = 'scratch operand']
  %s0 = inlined_call_operand.hbm [shape: f32[16,32], index: 0, kind: input, shape index: {}]
  %s1 = inlined_call_operand.hbm [shape: f32[16,32], index: 1, kind: input, shape index: {}]
  %s2 = inlined_call_operand.hbm [shape: f32[16,32], index: 2, kind: input, shape index: {}]
  %s3 = inlined_call_operand.vmem [shape: f32[8,128], index: 3, kind: output, shape index: {}]
  %s4 = sld [smem:[#allocation0]]
  $region42: #{nll_loss.1} parent=0
    _
  %s6 = ssub.s32 1, %s4
  %s7 = scalar_select 0, %s6, %s4
  $region1: #{nll_loss.1} parent=0
    #allocation3 [shape = 'u8[8192]{0}', space=vmem, size = 0x2000, scoped, tag = 'input window, operand 0, single buffered']
    #allocation4 [shape = 's32[1]{0}', space=sflag, size = 0x4, scoped, tag = 'scoped memory for nll_loss.1']
    #allocation5 [shape = 'u8[8192]{0}', space=vmem, size = 0x2000, scoped, tag = 'input window, operand 1, single buffered']
    #allocation6 [shape = 's32[1]{0}', space=sflag, size = 0x4, scoped, tag = 'scoped memory for nll_loss.1']
    #allocation7 [shape = 'u8[8192]{0}', space=vmem, size = 0x2000, scoped, tag = 'input window, operand 2, single buffered']
    %8 = vsyncpa [#allocation4], 0
    %9 = vsyncpa [#allocation6], 0
    // Predicated region
    $region2: #{nll_loss.1} parent=1 // pred_check
      _
    $region3: #{nll_loss.1} parent=1 // pred_check_branch
      %11 = sbr.rel (0) target = $region5
    $region4: #{nll_loss.1} parent=1 // pred_region
      %s12 = sadd.s32 0, 0
      %p13 = scmp.lt.s32.totalorder %s12, 0
      %s14 = scalar_select %p13, %s12, 0
      %s15 = smul.u32 2, %s14
      %17 = vsyncadd [#allocation4], 0
      %s18 = smul.addr %s15, 8
      %s19 = scalar_lea.hbm %s0, %s18
      %s20 = sshll.u32 %s19, 4
      %s21 = int_to_ptr.hbm [resolvable:$true] %s20
      %s22 = sshll.u32 [#allocation3], 4
      %s23 = int_to_ptr.vmem [resolvable:$true] %s22
      %28 = dma.hbm_to_vmem [thread:$0]  %s21, 256, %s23, [#allocation4], 128, 128, 8
    $region5: #{nll_loss.1} parent=1 // pred_fallthru
      _
    // Predicated region
    $region6: #{nll_loss.1} parent=1 // pred_check
      _
    $region7: #{nll_loss.1} parent=1 // pred_check_branch
      %30 = sbr.rel (0) target = $region9
    $region8: #{nll_loss.1} parent=1 // pred_region
      %s31 = sadd.s32 0, 0
      %p32 = scmp.lt.s32.totalorder %s31, 0
      %s33 = scalar_select %p32, %s31, 0
      %s34 = smul.u32 2, %s33
      %36 = vsyncadd [#allocation6], 0
      %s37 = smul.addr %s34, 8
      %s38 = scalar_lea.hbm %s1, %s37
      %s39 = sshll.u32 %s38, 4
      %s40 = int_to_ptr.hbm [resolvable:$true] %s39
      %s41 = sshll.u32 [#allocation5], 4
      %s42 = int_to_ptr.vmem [resolvable:$true] %s41
      %47 = dma.hbm_to_vmem [thread:$0]  %s40, 256, %s42, [#allocation6], 128, 128, 8
    $region9: #{nll_loss.1} parent=1 // pred_fallthru
      _
    // Predicated region
    $region10: #{nll_loss.1} parent=1 // pred_check
      _
    $region11: #{nll_loss.1} parent=1 // pred_check_branch
      %49 = sbr.rel (0) target = $region13
    $region12: #{nll_loss.1} parent=1 // pred_region
      %s50 = sadd.s32 0, 0
      %p51 = scmp.lt.s32.totalorder %s50, 0
      %s52 = scalar_select %p51, %s50, 0
      %s53 = smul.u32 2, %s52
      %55 = vsyncadd [#allocation6], 0
      %s56 = smul.addr %s53, 8
      %s57 = scalar_lea.hbm %s2, %s56
      %s58 = sshll.u32 %s57, 4
      %s59 = int_to_ptr.hbm [resolvable:$true] %s58
      %s60 = sshll.u32 [#allocation7], 4
      %s61 = int_to_ptr.vmem [resolvable:$true] %s60
      %66 = dma.hbm_to_vmem [thread:$0]  %s59, 256, %s61, [#allocation6], 128, 128, 8
    $region13: #{nll_loss.1} parent=1 // pred_fallthru
      _
    // Predicated region
    $region14: #{nll_loss.1} parent=1 // pred_check
      _
    $region15: #{nll_loss.1} parent=1 // pred_check_branch
      %68 = sbr.rel (0) target = $region17
    $region16: #{nll_loss.1} parent=1 // pred_region
      %70 = dma.done [#allocation4], 256
    $region17: #{nll_loss.1} parent=1 // pred_fallthru
      _
    // Predicated region
    $region18: #{nll_loss.1} parent=1 // pred_check
      _
    $region19: #{nll_loss.1} parent=1 // pred_check_branch
      %72 = sbr.rel (0) target = $region21
    $region20: #{nll_loss.1} parent=1 // pred_region
      %74 = dma.done [#allocation6], 256
    $region21: #{nll_loss.1} parent=1 // pred_fallthru
      _
    // Predicated region
    $region22: #{nll_loss.1} parent=1 // pred_check
      _
    $region23: #{nll_loss.1} parent=1 // pred_check_branch
      %76 = sbr.rel (0) target = $region25
    $region24: #{nll_loss.1} parent=1 // pred_region
      %78 = dma.done [#allocation6], 256
    $region25: #{nll_loss.1} parent=1 // pred_fallthru
      _
    %s79 = sadd.s32 0, 0
    %p80 = scmp.lt.s32.totalorder %s79, 0
    %s81 = scalar_select %p80, %s79, 0
    %s82 = smul.u32 2, %s81
    %s83 = sadd.s32 0, 0
    %p84 = scmp.lt.s32.totalorder %s83, 0
    %s85 = scalar_select %p84, %s83, 0
    %s86 = smul.u32 2, %s85
    %s87 = sadd.s32 0, 0
    %p88 = scmp.lt.s32.totalorder %s87, 0
    %s89 = scalar_select %p88, %s87, 0
    %s90 = smul.u32 2, %s89
    %p91 = scmp.eq.s32.totalorder 0, 0
    // Predicated region
    $region26: #{nll_loss.1} parent=1 // pred_check
      %p92 = pneg %p91
    $region27: #{nll_loss.1} parent=1 // pred_check_branch
      %94 = sbr.rel (%p92) target = $region29
    $region28: #{nll_loss.1} parent=1 // pred_region
      %vm95 = vcmask 261120
      %96 = vst.msk [vmem:[#allocation2] sm:$0xff] %vm95, 0.0
      %97 = vst.msk [vmem:[#allocation2 + $0x8] sm:$0xff] %vm95, 0.0
    $region29: #{nll_loss.1} parent=1 // pred_fallthru
      _
    %v98 = vld [vmem:[#allocation3] sm:$0xff]
    %v99 = vld [vmem:[#allocation3 + $0x8] sm:$0xff]
    %v100 = vld [vmem:[#allocation5] sm:$0xff]
    %v101 = vld [vmem:[#allocation5 + $0x8] sm:$0xff]
    %v102 = vld [vmem:[#allocation7] sm:$0xff]
    %v103 = vld [vmem:[#allocation7 + $0x8] sm:$0xff]
    %v104 = vsub.f32 %v98, %v100
    %v105 = vsub.f32 %v99, %v101
    %v106 = vsub.f32 0.0, %v102
    %v107 = vsub.f32 0.0, %v103
    %v108 = vmul.f32 %v106, 1.442695
    %v109 = vpow.pop %v108
    %v110 = vmul.f32 %v107, 1.442695
    %v111 = vpow.pop %v110
    %v112 = vmul.f32 %v109, %v104
    %v113 = vmul.f32 %v111, %v105
    %v114 = vmul.f32 %v112, %v104
    %v115 = vmul.f32 %v113, %v105
    %v116 = vadd.f32 %v114, %v102
    %v117 = vadd.f32 %v115, %v103
    %v118 = vld [vmem:[#allocation2] sm:$0xff]
    %v119 = vld [vmem:[#allocation2 + $0x8] sm:$0xff]
    %v120 = vadd.f32 %v118, %v116
    %v121 = vadd.f32 %v119, %v117
    %vm122 = vcmask 261120
    %123 = vst.msk [vmem:[#allocation2] sm:$0xff] %vm122, %v120
    %124 = vst.msk [vmem:[#allocation2 + $0x8] sm:$0xff] %vm122, %v121
    // Predicated region
    $region30: #{nll_loss.1} parent=1 // pred_check
      %p125 = pneg %p91
    $region31: #{nll_loss.1} parent=1 // pred_check_branch
      %127 = sbr.rel (%p125) target = $region33
    $region32: #{nll_loss.1} parent=1 // pred_region
      %v128 = vld [vmem:[#allocation2] sm:$0xff]
      %v129 = vld [vmem:[#allocation2 + $0x8] sm:$0xff]
      %v130 = vsel %vm122, %v128, 0.0
      %131 = vadd.xlane.f32.xlu0 %v130
      %v132 = vpop.xlane.xlu0 %131
      %v133 = vsel %vm122, %v129, 0.0
      %134 = vadd.xlane.f32.xlu0 %v133
      %v135 = vpop.xlane.xlu0 %134
      %v136 = vadd.f32 %v132, %v135
      %v137 = vrot.slane %v136, 4
      %v138 = vadd.f32 %v136, %v137
      %v139 = vrot.slane %v138, 2
      %v140 = vadd.f32 %v138, %v139
      %v141 = vrot.slane %v140, 1
      %v142 = vadd.f32 %v140, %v141
      %143 = vst [vmem:[%s3] sm:$0xff] %v142
    $region33: #{nll_loss.1} parent=1 // pred_fallthru
      _
    // Predicated region
    $region34: #{nll_loss.1} parent=1 // pred_check
      _
    $region35: #{nll_loss.1} parent=1 // pred_check_branch
      %145 = sbr.rel (0) target = $region37
    $region36: #{nll_loss.1} parent=1 // pred_region
      _
    $region37: #{nll_loss.1} parent=1 // pred_fallthru
      _
    // Predicated region
    $region38: #{nll_loss.1} parent=1 // pred_check
      _
    $region39: #{nll_loss.1} parent=1 // pred_check_branch
      %147 = sbr.rel (0) target = $region41
    $region40: #{nll_loss.1} parent=1 // pred_region
      _
    $region41: #{nll_loss.1} parent=1 // pred_fallthru
      _
    %148 = vsyncpa [#allocation4], 1
    %149 = vsyncpa [#allocation6], 1

</llo_original>
